<compile_context>
chip_gen: v5e
topology: v5e:2x2
jax: 0.10.0
libtpu: 0.0.40
codegen_flags: <defaults>
</compile_context>

<pallas_src>
import functools

import jax
import jax.numpy as jnp
from jax import lax
from jax.experimental import pallas as pl
from jax.experimental.pallas import tpu as pltpu


# ----------------------------------------------------------------------------- helpers

def _round_up(x, m):
    return (x + m - 1) // m * m


def _erf_approx(x):
    # Abramowitz & Stegun 7.1.26 (max abs err ~1.5e-7). Uses only exp/mul/add/where, which all
    # lower cleanly in Mosaic, while matching PyTorch's exact (erf-based) GELU semantics.
    a1, a2, a3, a4, a5 = 0.254829592, -0.284496736, 1.421413741, -1.453152027, 1.061405429
    p = 0.3275911
    sign = jnp.where(x >= 0.0, 1.0, -1.0)
    ax = jnp.abs(x)
    t = 1.0 / (1.0 + p * ax)
    poly = ((((a5 * t + a4) * t + a3) * t + a2) * t + a1) * t
    return sign * (1.0 - poly * jnp.exp(-ax * ax))


def _gelu_exact(x):
    return 0.5 * x * (1.0 + _erf_approx(x * 0.7071067811865476))


# ------------------------------------------------------------ fused linear (+LN / +act / +res)

def _fused_linear_kernel(*refs, ln_eps, activation, has_ln, has_residual):
    x_ref, w_ref, b_ref = refs[0], refs[1], refs[2]
    idx = 3
    if has_ln:
        g_ref, beta_ref = refs[idx], refs[idx + 1]
        idx += 2
    if has_residual:
        r_ref = refs[idx]
        idx += 1
    o_ref = refs[idx]

    x = x_ref[...].astype(jnp.float32)
    if has_ln:
        mean = jnp.mean(x, axis=-1, keepdims=True)
        xc = x - mean
        var = jnp.mean(xc * xc, axis=-1, keepdims=True)
        x = xc * lax.rsqrt(var + ln_eps)
        x = x * g_ref[...].astype(jnp.float32) + beta_ref[...].astype(jnp.float32)

    # Weight stays in its native [N, K] nn.Linear layout; contract on K (dim 1 of both).
    acc = lax.dot_general(
        x, w_ref[...].astype(jnp.float32),
        dimension_numbers=(((1,), (1,)), ((), ())),
        preferred_element_type=jnp.float32,
    )
    acc = acc + b_ref[...].astype(jnp.float32)
    if activation == "gelu":
        acc = _gelu_exact(acc)
    if has_residual:
        acc = acc + r_ref[...].astype(jnp.float32)
    o_ref[...] = acc.astype(o_ref.dtype)


def fused_linear(x, w, b, *, ln=None, activation=None, residual=None, tm=256):
    """y = act(maybe_layernorm(x) @ w.T + b) [+ residual].  x: [M,K], w: [N,K], b: [N]."""
    M, K = x.shape
    N = w.shape[0]
    dt = x.dtype

    # --- tile selection: big tiles, no K grid axis, lane/sublane-aligned blocks ---
    if M >= tm:
        tm_eff = tm
        M_pad = _round_up(M, tm)
    else:
        M_pad = _round_up(M, 8)
        tm_eff = M_pad
    if N % 512 == 0:
        tn = 512
    elif N % 256 == 0:
        tn = 256
    elif N % 128 == 0:
        tn = 128
    else:
        tn = N  # full-width block is always layout-legal

    x_p = x if M_pad == M else jnp.pad(x, ((0, M_pad - M), (0, 0)))
    has_ln = ln is not None
    has_res = residual is not None
    res_p = None
    if has_res:
        res_p = residual if M_pad == M else jnp.pad(residual, ((0, M_pad - M), (0, 0)))

    b2 = b.reshape(1, N)
    if has_ln:
        g, beta, eps = ln
        g2, beta2 = g.reshape(1, K), beta.reshape(1, K)
    else:
        eps = 0.0

    # N-tiles outer / M-tiles inner: the weight slab's block index is constant across the inner
    # loop, so each weight slab is DMA'd once and reused for every token tile.
    grid = (N // tn, M_pad // tm_eff)

    in_specs = [
        pl.BlockSpec((tm_eff, K), lambda j, i: (i, 0)),   # activations (full K)
        pl.BlockSpec((tn, K), lambda j, i: (j, 0)),       # weight, native [N, K] layout
        pl.BlockSpec((1, tn), lambda j, i: (0, j)),       # bias
    ]
    args = [x_p, w, b2]
    if has_ln:
        in_specs += [pl.BlockSpec((1, K), lambda j, i: (0, 0)),
                     pl.BlockSpec((1, K), lambda j, i: (0, 0))]
        args += [g2, beta2]
    if has_res:
        in_specs.append(pl.BlockSpec((tm_eff, tn), lambda j, i: (i, j)))
        args.append(res_p)

    kernel = functools.partial(_fused_linear_kernel, ln_eps=eps, activation=activation,
                               has_ln=has_ln, has_residual=has_res)

    bytes_accessed = dt.itemsize * (M_pad * K + N * K + N + M_pad * N
                                    + (M_pad * N if has_res else 0)
                                    + (2 * K if has_ln else 0))
    cost = pl.CostEstimate(
        flops=int(2 * M_pad * K * N),
        transcendentals=int(M_pad * N) if activation == "gelu" else 0,
        bytes_accessed=int(bytes_accessed),
    )

    out = pl.pallas_call(
        kernel,
        out_shape=jax.ShapeDtypeStruct((M_pad, N), dt),
        grid_spec=pltpu.PrefetchScalarGridSpec(
            num_scalar_prefetch=0,
            grid=grid,
            in_specs=in_specs,
            out_specs=pl.BlockSpec((tm_eff, tn), lambda j, i: (i, j)),
        ),
        compiler_params=pltpu.CompilerParams(
            dimension_semantics=("parallel", "parallel")),
        cost_estimate=cost,
    )(*args)

    return out if M_pad == M else out[:M]


# ------------------------------------------------------------------------- attention kernel

def _attention_kernel(q_ref, k_ref, v_ref, mask_ref, hm_ref, o_ref, *, scale):
    q = q_ref[0, 0].astype(jnp.float32) * scale          # [S, Dh]
    k = k_ref[0, 0].astype(jnp.float32)                  # [S, Dh]
    v = v_ref[0, 0].astype(jnp.float32)                  # [S, Dh]

    s = lax.dot_general(q, k, dimension_numbers=(((1,), (1,)), ((), ())),
                        preferred_element_type=jnp.float32)       # [S, S]
    s = s + mask_ref[0, 0].astype(jnp.float32)

    m = jnp.max(s, axis=-1, keepdims=True)
    p = jnp.exp(s - m)
    p = p / jnp.sum(p, axis=-1, keepdims=True)

    hm = hm_ref[pl.program_id(1)].astype(jnp.float32)    # per-head mask scalar from SMEM
    out = jnp.dot(p, v, preferred_element_type=jnp.float32) * hm
    o_ref[0, 0] = out.astype(o_ref.dtype)


def multi_head_attention(q, k, v, attn_mask, head_mask, *, scale):
    """q/k/v: [B, H, S, Dh]; attn_mask: [B, 1, S, S] additive; head_mask: [H]."""
    B, H, S, Dh = q.shape
    # TODO(synk): for very long audio sequences where the [S, S] score tile no longer fits VMEM,
    # switch this to an online-softmax (flash) variant with a KV grid axis.
    qkv_spec = pl.BlockSpec((1, 1, S, Dh), lambda b, h: (b, h, 0, 0))
    mask_spec = pl.BlockSpec((1, 1, S, S), lambda b, h: (b, 0, 0, 0))
    hm_spec = pl.BlockSpec(memory_space=pltpu.MemorySpace.SMEM)

    cost = pl.CostEstimate(
        flops=int(4 * B * H * S * S * Dh),
        transcendentals=int(B * H * S * S),
        bytes_accessed=int(q.dtype.itemsize * (4 * B * H * S * Dh + B * S * S + H)),
    )
    return pl.pallas_call(
        functools.partial(_attention_kernel, scale=scale),
        out_shape=jax.ShapeDtypeStruct((B, H, S, Dh), q.dtype),
        grid_spec=pltpu.PrefetchScalarGridSpec(
            num_scalar_prefetch=0,
            grid=(B, H),
            in_specs=[qkv_spec, qkv_spec, qkv_spec, mask_spec, hm_spec],
            out_specs=pl.BlockSpec((1, 1, S, Dh), lambda b, h: (b, h, 0, 0)),
        ),
        compiler_params=pltpu.CompilerParams(
            dimension_semantics=("parallel", "parallel")),
        cost_estimate=cost,
    )(q, k, v, attn_mask, head_mask)


# ---------------------------------------------------------------------- full encoder layer

def qwen2_audio_encoder_layer(hidden_states, params, attention_mask=None,
                              layer_head_mask=None, *, num_heads, ln_eps=1e-5):
    B, S, D = hidden_states.shape
    H = num_heads
    Dh = D // H
    scale = Dh ** -0.5
    M = B * S
    x = hidden_states.reshape(M, D)

    if attention_mask is None:
        attention_mask = jnp.zeros((B, 1, S, S), hidden_states.dtype)
    if layer_head_mask is None:
        layer_head_mask = jnp.ones((H,), hidden_states.dtype)

    # --- self-attention block: LayerNorm fused into the fused QKV projection ---
    # params["qkv_w"]/["qkv_b"] are pre-fused at parameter-build time (k_proj bias = 0),
    # so no per-call weight copies are created.
    qkv = fused_linear(x, params["qkv_w"], params["qkv_b"],
                       ln=(params["ln1_g"], params["ln1_b"], ln_eps))
    q, k, v = jnp.split(qkv, 3, axis=-1)

    def to_heads(t):
        return t.reshape(B, S, H, Dh).transpose(0, 2, 1, 3)

    attn = multi_head_attention(to_heads(q), to_heads(k), to_heads(v),
                                attention_mask, layer_head_mask, scale=scale)
    attn = attn.transpose(0, 2, 1, 3).reshape(M, D)

    # out_proj + bias + first residual, fused
    h = fused_linear(attn, params["o_w"], params["o_b"], residual=x)

    # --- MLP block: LayerNorm + fc1 + GELU fused; fc2 + second residual fused ---
    ff = fused_linear(h, params["fc1_w"], params["fc1_b"],
                      ln=(params["ln2_g"], params["ln2_b"], ln_eps),
                      activation="gelu")
    out = fused_linear(ff, params["fc2_w"], params["fc2_b"], residual=h)
    # fp16 inf/nan clamp from the PyTorch code never triggers for fp32 inputs (omitted).
    return out.reshape(B, S, D)


# ----------------------------------------------------------------------- reference + params

def _reference_layer(x, p, attn_mask, head_mask, num_heads, eps=1e-5):
    B, S, D = x.shape
    Dh = D // num_heads
    scale = Dh ** -0.5

    def ln(h, g, b):
        mu = jnp.mean(h, axis=-1, keepdims=True)
        var = jnp.mean((h - mu) ** 2, axis=-1, keepdims=True)
        return (h - mu) / jnp.sqrt(var + eps) * g + b

    residual = x
    h = ln(x, p["ln1_g"], p["ln1_b"])
    q = (h @ p["q_w"].T + p["q_b"]) * scale
    k = h @ p["k_w"].T
    v = h @ p["v_w"].T + p["v_b"]

    def heads(t):
        return t.reshape(B, S, num_heads, Dh).transpose(0, 2, 1, 3)

    q, k, v = heads(q), heads(k), heads(v)
    scores = jnp.einsum("bhqd,bhkd->bhqk", q, k) + attn_mask
    w = jax.nn.softmax(scores, axis=-1)
    w = w * head_mask[None, :, None, None]
    o = jnp.einsum("bhqk,bhkd->bhqd", w, v)
    o = o.transpose(0, 2, 1, 3).reshape(B, S, D)
    o = o @ p["o_w"].T + p["o_b"]
    h = residual + o

    residual = h
    h2 = ln(h, p["ln2_g"], p["ln2_b"])
    h2 = jax.nn.gelu(h2 @ p["fc1_w"].T + p["fc1_b"], approximate=False)
    h2 = h2 @ p["fc2_w"].T + p["fc2_b"]
    return residual + h2


def make_params(key, D, H, ffn):
    keys = jax.random.split(key, 16)

    def linear_init(kw, kb, out_f, in_f, bias=True):
        bound = 1.0 / (in_f ** 0.5)
        w = jax.random.uniform(kw, (out_f, in_f), jnp.float32, -bound, bound)
        b = jax.random.uniform(kb, (out_f,), jnp.float32, -bound, bound) if bias else None
        return w, b

    q_w, q_b = linear_init(keys[0], keys[1], D, D)
    k_w, _ = linear_init(keys[2], keys[3], D, D, bias=False)
    v_w, v_b = linear_init(keys[4], keys[5], D, D)
    o_w, o_b = linear_init(keys[6], keys[7], D, D)
    fc1_w, fc1_b = linear_init(keys[8], keys[9], ffn, D)
    fc2_w, fc2_b = linear_init(keys[10], keys[11], D, ffn)
    ln1_g = 1.0 + 0.1 * jax.random.normal(keys[12], (D,), jnp.float32)
    ln1_b = 0.1 * jax.random.normal(keys[13], (D,), jnp.float32)
    ln2_g = 1.0 + 0.1 * jax.random.normal(keys[14], (D,), jnp.float32)
    ln2_b = 0.1 * jax.random.normal(keys[15], (D,), jnp.float32)

    params = dict(q_w=q_w, q_b=q_b, k_w=k_w, v_w=v_w, v_b=v_b, o_w=o_w, o_b=o_b,
                  fc1_w=fc1_w, fc1_b=fc1_b, fc2_w=fc2_w, fc2_b=fc2_b,
                  ln1_g=ln1_g, ln1_b=ln1_b, ln2_g=ln2_g, ln2_b=ln2_b)
    # One-time QKV fusion (done at load time, NOT per forward call): k_proj has no bias.
    params["qkv_w"] = jnp.concatenate([q_w, k_w, v_w], axis=0)
    params["qkv_b"] = jnp.concatenate([q_b, jnp.zeros((D,), jnp.float32), v_b], axis=0)
    return params


if __name__ == "__main__":
    # Small synthetic config (real model: d_model=1280, 20 heads, ffn=5120, S~1500).
    B, S, D, H, FFN = 2, 64, 256, 4, 512

    key = jax.random.PRNGKey(0)
    k_x, k_p, k_hm = jax.random.split(key, 3)

    params = make_params(k_p, D, H, FFN)
    hidden = jax.random.normal(k_x, (B, S, D), dtype=jnp.float32)

    # Additive attention mask (pad-mask the last 8 key positions of batch 1) + head mask.
    attn_mask = jnp.zeros((B, 1, S, S), jnp.float32)
    attn_mask = attn_mask.at[1, :, :, S - 8:].set(-1e9)
    head_mask = 0.5 + jax.random.uniform(k_hm, (H,), jnp.float32)

    y = qwen2_audio_encoder_layer(hidden, params, attn_mask, head_mask, num_heads=H)
    y = jax.block_until_ready(y)

    with jax.default_matmul_precision("highest"):
        y_ref = _reference_layer(hidden, params, attn_mask, head_mask, H)

    assert y.shape == (B, S, D)
    assert jnp.allclose(y, y_ref, atol=2e-3, rtol=2e-3), float(jnp.max(jnp.abs(y - y_ref)))
    print("KERNEL_OK")
</pallas_src>

<mosaic_0001>
module attributes {stable_mosaic.version = 11 : i64} {
  func.func @_fused_linear_kernel(%arg0: i32, %arg1: i32, %arg2: memref<128x256xf32, #tpu.memory_space<vmem>>, %arg3: memref<256x256xf32, #tpu.memory_space<vmem>>, %arg4: memref<1x256xf32, #tpu.memory_space<vmem>>, %arg5: memref<1x256xf32, #tpu.memory_space<vmem>>, %arg6: memref<1x256xf32, #tpu.memory_space<vmem>>, %arg7: memref<128x256xf32, #tpu.memory_space<vmem>>) attributes {dimension_semantics = [#tpu.dimension_semantics<parallel>, #tpu.dimension_semantics<parallel>], iteration_bounds = array<i64: 3, 1>, scalar_prefetch = 0 : i64, scratch_operands = 0 : i64, tpu.core_type = #tpu.core_type<tc>, window_params = [{transform_indices = @transform_0, window_bounds = array<i64: 128, 256>}, {transform_indices = @transform_1, window_bounds = array<i64: 256, 256>}, {transform_indices = @transform_2, window_bounds = array<i64: 1, 256>}, {pipeline_mode = #tpu.pipeline_mode<synchronous>, transform_indices = @transform_3, window_bounds = array<i64: 1, 256>}, {pipeline_mode = #tpu.pipeline_mode<synchronous>, transform_indices = @transform_4, window_bounds = array<i64: 1, 256>}, {transform_indices = @transform_5, window_bounds = array<i64: 128, 256>}]} {
    %c0 = arith.constant 0 : index
    %c0_0 = arith.constant 0 : index
    %0 = vector.load %arg2[%c0, %c0_0] : memref<128x256xf32, #tpu.memory_space<vmem>>, vector<128x256xf32>
    %cst = arith.constant dense<0.000000e+00> : vector<128xf32>
    %1 = vector.multi_reduction <add>, %0, %cst [1] : vector<128x256xf32> to vector<128xf32>
    %2 = vector.shape_cast %1 : vector<128xf32> to vector<128x1xf32>
    %cst_1 = arith.constant 2.560000e+02 : f32
    %3 = vector.broadcast %cst_1 : f32 to vector<128x1xf32>
    %4 = arith.divf %2, %3 : vector<128x1xf32>
    %5 = vector.broadcast %4 : vector<128x1xf32> to vector<128x256xf32>
    %6 = arith.subf %0, %5 : vector<128x256xf32>
    %7 = arith.mulf %6, %6 : vector<128x256xf32>
    %cst_2 = arith.constant dense<0.000000e+00> : vector<128xf32>
    %8 = vector.multi_reduction <add>, %7, %cst_2 [1] : vector<128x256xf32> to vector<128xf32>
    %9 = vector.shape_cast %8 : vector<128xf32> to vector<128x1xf32>
    %cst_3 = arith.constant 2.560000e+02 : f32
    %10 = vector.broadcast %cst_3 : f32 to vector<128x1xf32>
    %11 = arith.divf %9, %10 : vector<128x1xf32>
    %cst_4 = arith.constant 9.99999974E-6 : f32
    %12 = vector.broadcast %cst_4 : f32 to vector<128x1xf32>
    %13 = arith.addf %11, %12 : vector<128x1xf32>
    %14 = math.rsqrt %13 : vector<128x1xf32>
    %15 = vector.broadcast %14 : vector<128x1xf32> to vector<128x256xf32>
    %16 = arith.mulf %6, %15 : vector<128x256xf32>
    %c0_5 = arith.constant 0 : index
    %c0_6 = arith.constant 0 : index
    %17 = vector.load %arg5[%c0_5, %c0_6] : memref<1x256xf32, #tpu.memory_space<vmem>>, vector<1x256xf32>
    %18 = vector.broadcast %17 : vector<1x256xf32> to vector<128x256xf32>
    %19 = arith.mulf %16, %18 : vector<128x256xf32>
    %c0_7 = arith.constant 0 : index
    %c0_8 = arith.constant 0 : index
    %20 = vector.load %arg6[%c0_7, %c0_8] : memref<1x256xf32, #tpu.memory_space<vmem>>, vector<1x256xf32>
    %21 = vector.broadcast %20 : vector<1x256xf32> to vector<128x256xf32>
    %22 = arith.addf %19, %21 : vector<128x256xf32>
    %c0_9 = arith.constant 0 : index
    %c0_10 = arith.constant 0 : index
    %23 = vector.load %arg3[%c0_9, %c0_10] : memref<256x256xf32, #tpu.memory_space<vmem>>, vector<256x256xf32>
    %cst_11 = arith.constant dense<0.000000e+00> : vector<128x256xf32>
    %24 = tpu.matmul %22, %23, %cst_11 {dimension_numbers = #tpu.dot_dimension_numbers<[1], [1], [0], [0], [0, 0, 1, 0], [], []>} : vector<128x256xf32>, vector<256x256xf32>, vector<128x256xf32> -> vector<128x256xf32>
    %c0_12 = arith.constant 0 : index
    %c0_13 = arith.constant 0 : index
    %25 = vector.load %arg4[%c0_12, %c0_13] : memref<1x256xf32, #tpu.memory_space<vmem>>, vector<1x256xf32>
    %26 = vector.broadcast %25 : vector<1x256xf32> to vector<128x256xf32>
    %27 = arith.addf %24, %26 : vector<128x256xf32>
    %c0_14 = arith.constant 0 : index
    %c0_15 = arith.constant 0 : index
    %28 = vector.load %arg7[%c0_14, %c0_15] : memref<128x256xf32, #tpu.memory_space<vmem>>, vector<128x256xf32>
    tpu.vector_store %arg7[%c0_14, %c0_15], %27 {strides = array<i32>} : memref<128x256xf32, #tpu.memory_space<vmem>>, vector<128x256xf32>,
    return
  }
  func.func @transform_0(%arg0: i32, %arg1: i32) -> (i32, i32) {
    %c0_i32 = arith.constant 0 : i32
    %c0_i32_0 = arith.constant 0 : i32
    return %arg1, %c0_i32 : i32, i32
  }
  func.func @transform_1(%arg0: i32, %arg1: i32) -> (i32, i32) {
    %c0_i32 = arith.constant 0 : i32
    %c0_i32_0 = arith.constant 0 : i32
    return %arg0, %c0_i32 : i32, i32
  }
  func.func @transform_2(%arg0: i32, %arg1: i32) -> (i32, i32) {
    %c0_i32 = arith.constant 0 : i32
    %c0_i32_0 = arith.constant 0 : i32
    return %c0_i32, %arg0 : i32, i32
  }
  func.func @transform_3(%arg0: i32, %arg1: i32) -> (i32, i32) {
    %c0_i32 = arith.constant 0 : i32
    %c0_i32_0 = arith.constant 0 : i32
    %c0_i32_1 = arith.constant 0 : i32
    return %c0_i32, %c0_i32_0 : i32, i32
  }
  func.func @transform_4(%arg0: i32, %arg1: i32) -> (i32, i32) {
    %c0_i32 = arith.constant 0 : i32
    %c0_i32_0 = arith.constant 0 : i32
    %c0_i32_1 = arith.constant 0 : i32
    return %c0_i32, %c0_i32_0 : i32, i32
  }
  func.func @transform_5(%arg0: i32, %arg1: i32) -> (i32, i32) {
    %c0_i32 = arith.constant 0 : i32
    return %arg1, %arg0 : i32, i32
  }
}

</mosaic_0001>

<llo_original>
// kernel: tpu_custom_call.1
$region0: #{tpu_custom_call.1}
  #allocation0 [shape = 'u32[]', space=smem, size = 0x4, offset = 0x4, fixed_abs, tag = 'smem constant byte address 0x4 - core index']
  #allocation1 [shape = 'u32[72,128]{1,0:T(1,128)}', space=vmem, size = 0x9000, scoped, tag = 'internal scratch']
  %s0 = inlined_call_operand.hbm [shape: f32[128,256], index: 0, kind: input, shape index: {}]
  %s1 = inlined_call_operand.hbm [shape: f32[768,256], index: 1, kind: input, shape index: {}]
  %s2 = inlined_call_operand.hbm [shape: f32[1,768], index: 2, kind: input, shape index: {}]
  %s3 = inlined_call_operand.vmem [shape: f32[1,256], index: 3, kind: input, shape index: {}]
  %s4 = inlined_call_operand.hbm [shape: f32[1,256], index: 4, kind: input, shape index: {}]
  %s5 = inlined_call_operand.hbm [shape: f32[128,768], index: 5, kind: output, shape index: {}]
  %s6 = sld [smem:[#allocation0]]
  $region69: #{tpu_custom_call.1} parent=0
    _
  %s8 = ssub.s32 1, %s6
  %s9 = scalar_select 0, %s8, %s6
  $region1: #{tpu_custom_call.1} parent=0
    #allocation2 [shape = 'u8[131072]{0}', space=vmem, size = 0x20000, scoped, tag = 'input window, operand 0, single buffered']
    #allocation3 [shape = 's32[2]{0}', space=sflag, size = 0x8, scoped, tag = 'scoped memory for tpu_custom_call.1']
    #allocation4 [shape = 's32[2]{0}', space=sflag, size = 0x8, scoped, tag = 'scoped memory for tpu_custom_call.1']
    #allocation5 [shape = 'u8[524288]{0}', space=vmem, size = 0x80000, scoped, tag = 'input window, operand 1']
    #allocation6 [shape = 's32[2]{0}', space=sflag, size = 0x8, scoped, tag = 'scoped memory for tpu_custom_call.1']
    #allocation7 [shape = 'u8[2048]{0}', space=vmem, size = 0x800, scoped, tag = 'input window, operand 2']
    #allocation8 [shape = 'u8[1024]{0}', space=vmem, size = 0x400, scoped, tag = 'input window, operand 4, single buffered']
    #allocation9 [shape = 's32[1]{0}', space=sflag, size = 0x4, scoped, tag = 'scoped memory for tpu_custom_call.1']
    #allocation10 [shape = 'u8[262144]{0}', space=vmem, size = 0x40000, scoped, tag = 'output window, operand 0']
    %10 = vsyncpa [#allocation3], 0
    %11 = vsyncpa [#allocation6], 0
    %s12 = scalar_lea.sflag [#allocation6], 1
    %13 = vsyncpa %s12, 0
    %14 = vsyncpa [#allocation9], 0
    %15 = vsyncpa [#allocation4], 0
    %s16 = scalar_lea.sflag [#allocation4], 1
    %17 = vsyncpa %s16, 0
    loop: start=0, step=1, limit=5
    $region2: #{tpu_custom_call.1} parent=1 // loop_pre_header
      _
    $region3: #{tpu_custom_call.1} parent=1 // loop_header
      %s19 = sphi 0, %s23
      %p20 = scmp.ge.s32.totalorder %s19, 5
      %s26 = sphi 0, %s38
      %s27 = sphi 0, %s34
      %s28 = sphi 0, %s26
      %s29 = sphi 0, %s27
      %s30 = sphi 0, %s28
      %s31 = sphi 0, %s29
      %s41 = sphi 0, %s43
      %s44 = sphi 0, %s41
      %s45 = sphi 0, %s44
      %s61 = sphi 0, %s45
      %s67 = sphi 0, %s69
      %s70 = sphi 0, %s67
      %s71 = sphi 0, %s70
      %s87 = sphi 0, %s71
      %s93 = sphi 0, %s95
      %s96 = sphi 0, %s93
      %s97 = sphi 0, %s96
      %s113 = sphi 0, %s97
      %s117 = sphi 0, %s117
      %s119 = sphi 0, %s117
      %s120 = sphi 0, %s119
      %s134 = sphi 0, %s120
      %s138 = sphi 0, %s138
      %s140 = sphi 0, %s138
      %s141 = sphi 0, %s140
      %s155 = sphi 0, %s141
      %s163 = sphi 0, %s165
      %s166 = sphi 0, %s163
      %s167 = sphi 0, %s166
      %s183 = sphi 0, %s167
    $region4: #{tpu_custom_call.1} parent=1 // loop_header_branch
      %22 = sbr.rel (%p20) target = $region8
    $region5: #{tpu_custom_call.1} parent=1 // loop_body
      %s24 = ssub.s32 %s19, 1
      %s25 = ssub.s32 %s19, 2
      %s32 = sadd.s32 1, %s27
      %p33 = scmp.ge.s32.totalorder %s32, 1
      %s34 = scalar_select %p33, 0, %s32
      %s35 = sadd.s32 1, %s26
      %s36 = scalar_select %p33, %s35, %s26
      %p37 = scmp.ge.s32.totalorder %s36, 3
      %s38 = scalar_select %p37, 0, %s36
      %s39 = ssub.s32 %s27, %s34
      %p40 = scmp.eq.s32.totalorder %s39, 0
      %s42 = sadd.s32 %s41, 1
      %s43 = scalar_select %p40, %s41, %s42
      %p46 = pneg %p40
      %p47 = scmp.eq.s32.totalorder %s19, 2
      %p48 = por %p46, %p47
      %p49 = scmp.ne.s32.totalorder %s41, %s44
      %p50 = scmp.eq.s32.totalorder %s19, 0
      %p51 = por %p49, %p50
      %p52 = scmp.ne.s32.totalorder %s41, %s44
      %p53 = scmp.eq.s32.totalorder %s24, 2
      %p54 = por %p52, %p53
      %p55 = scmp.ne.s32.totalorder %s44, %s45
      %p56 = scmp.eq.s32.totalorder %s24, 0
      %p57 = por %p55, %p56
      %p58 = scmp.ne.s32.totalorder %s44, %s45
      %p59 = scmp.eq.s32.totalorder %s25, 2
      %p60 = por %p58, %p59
      %p62 = scmp.ne.s32.totalorder %s45, %s61
      %p63 = scmp.eq.s32.totalorder %s25, 0
      %p64 = por %p62, %p63
      %s65 = ssub.s32 %s26, %s38
      %p66 = scmp.eq.s32.totalorder %s65, 0
      %s68 = sadd.s32 %s67, 1
      %s69 = scalar_select %p66, %s67, %s68
      %p72 = pneg %p66
      %p73 = scmp.eq.s32.totalorder %s19, 2
      %p74 = por %p72, %p73
      %p75 = scmp.ne.s32.totalorder %s67, %s70
      %p76 = scmp.eq.s32.totalorder %s19, 0
      %p77 = por %p75, %p76
      %p78 = scmp.ne.s32.totalorder %s67, %s70
      %p79 = scmp.eq.s32.totalorder %s24, 2
      %p80 = por %p78, %p79
      %p81 = scmp.ne.s32.totalorder %s70, %s71
      %p82 = scmp.eq.s32.totalorder %s24, 0
      %p83 = por %p81, %p82
      %p84 = scmp.ne.s32.totalorder %s70, %s71
      %p85 = scmp.eq.s32.totalorder %s25, 2
      %p86 = por %p84, %p85
      %p88 = scmp.ne.s32.totalorder %s71, %s87
      %p89 = scmp.eq.s32.totalorder %s25, 0
      %p90 = por %p88, %p89
      %s91 = ssub.s32 %s26, %s38
      %p92 = scmp.eq.s32.totalorder %s91, 0
      %s94 = sadd.s32 %s93, 1
      %s95 = scalar_select %p92, %s93, %s94
      %p98 = pneg %p92
      %p99 = scmp.eq.s32.totalorder %s19, 2
      %p100 = por %p98, %p99
      %p101 = scmp.ne.s32.totalorder %s93, %s96
      %p102 = scmp.eq.s32.totalorder %s19, 0
      %p103 = por %p101, %p102
      %p104 = scmp.ne.s32.totalorder %s93, %s96
      %p105 = scmp.eq.s32.totalorder %s24, 2
      %p106 = por %p104, %p105
      %p107 = scmp.ne.s32.totalorder %s96, %s97
      %p108 = scmp.eq.s32.totalorder %s24, 0
      %p109 = por %p107, %p108
      %p110 = scmp.ne.s32.totalorder %s96, %s97
      %p111 = scmp.eq.s32.totalorder %s25, 2
      %p112 = por %p110, %p111
      %p114 = scmp.ne.s32.totalorder %s97, %s113
      %p115 = scmp.eq.s32.totalorder %s25, 0
      %p116 = por %p114, %p115
      %s118 = sadd.s32 %s117, 1
      %p121 = scmp.eq.s32.totalorder %s19, 2
      %p122 = scmp.ne.s32.totalorder %s117, %s119
      %p123 = scmp.eq.s32.totalorder %s19, 0
      %p124 = por %p122, %p123
      %p125 = scmp.ne.s32.totalorder %s117, %s119
      %p126 = scmp.eq.s32.totalorder %s24, 2
      %p127 = por %p125, %p126
      %p128 = scmp.ne.s32.totalorder %s119, %s120
      %p129 = scmp.eq.s32.totalorder %s24, 0
      %p130 = por %p128, %p129
      %p131 = scmp.ne.s32.totalorder %s119, %s120
      %p132 = scmp.eq.s32.totalorder %s25, 2
      %p133 = por %p131, %p132
      %p135 = scmp.ne.s32.totalorder %s120, %s134
      %p136 = scmp.eq.s32.totalorder %s25, 0
      %p137 = por %p135, %p136
      %s139 = sadd.s32 %s138, 1
      %p142 = scmp.eq.s32.totalorder %s19, 2
      %p143 = scmp.ne.s32.totalorder %s138, %s140
      %p144 = scmp.eq.s32.totalorder %s19, 0
      %p145 = por %p143, %p144
      %p146 = scmp.ne.s32.totalorder %s138, %s140
      %p147 = scmp.eq.s32.totalorder %s24, 2
      %p148 = por %p146, %p147
      %p149 = scmp.ne.s32.totalorder %s140, %s141
      %p150 = scmp.eq.s32.totalorder %s24, 0
      %p151 = por %p149, %p150
      %p152 = scmp.ne.s32.totalorder %s140, %s141
      %p153 = scmp.eq.s32.totalorder %s25, 2
      %p154 = por %p152, %p153
      %p156 = scmp.ne.s32.totalorder %s141, %s155
      %p157 = scmp.eq.s32.totalorder %s25, 0
      %p158 = por %p156, %p157
      %s159 = ssub.s32 %s27, %s34
      %s160 = ssub.s32 %s26, %s38
      %s161 = sor.u32 %s159, %s160
      %p162 = scmp.eq.s32.totalorder %s161, 0
      %s164 = sadd.s32 %s163, 1
      %s165 = scalar_select %p162, %s163, %s164
      %p168 = pneg %p162
      %p169 = scmp.eq.s32.totalorder %s19, 2
      %p170 = por %p168, %p169
      %p171 = scmp.ne.s32.totalorder %s163, %s166
      %p172 = scmp.eq.s32.totalorder %s19, 0
      %p173 = por %p171, %p172
      %p174 = scmp.ne.s32.totalorder %s163, %s166
      %p175 = scmp.eq.s32.totalorder %s24, 2
      %p176 = por %p174, %p175
      %p177 = scmp.ne.s32.totalorder %s166, %s167
      %p178 = scmp.eq.s32.totalorder %s24, 0
      %p179 = por %p177, %p178
      %p180 = scmp.ne.s32.totalorder %s166, %s167
      %p181 = scmp.eq.s32.totalorder %s25, 2
      %p182 = por %p180, %p181
      %p184 = scmp.ne.s32.totalorder %s167, %s183
      %p185 = scmp.eq.s32.totalorder %s25, 0
      %p186 = por %p184, %p185
      %p187 = scmp.le.s32.totalorder 1, %s19
      %p188 = scmp.lt.s32.totalorder %s19, 4
      %p189 = pnand %p187, %p188
      %p190 = pneg %p189
      // Predicated region
      $region9: #{tpu_custom_call.1} parent=5 // pred_check
        _
      $region10: #{tpu_custom_call.1} parent=5 // pred_check_branch
        %192 = sbr.rel (%p189) target = $region12
      $region11: #{tpu_custom_call.1} parent=5 // pred_region
        %s193 = ssub.s32 %s19, 1
        // Predicated region
        $region13: #{tpu_custom_call.1} parent=11 // pred_check
          %p194 = pneg %p57
        $region14: #{tpu_custom_call.1} parent=11 // pred_check_branch
          %196 = sbr.rel (%p194) target = $region16
        $region15: #{tpu_custom_call.1} parent=11 // pred_region
          %s197 = smul.u32 16, %s29
          %199 = vsyncadd [#allocation3], 0
          %s200 = smul.addr %s197, 2
          %s201 = smul.addr %s200, 8
          %s202 = scalar_lea.hbm %s0, %s201
          %s203 = sshll.u32 %s202, 4
          %s204 = int_to_ptr.hbm [resolvable:$true] %s203
          %s205 = sshll.u32 [#allocation2], 4
          %s206 = int_to_ptr.vmem [resolvable:$true] %s205
          %211 = dma.hbm_to_vmem [thread:$0]  %s204, 4096, %s206, [#allocation3], 256, 256, 16
        $region16: #{tpu_custom_call.1} parent=11 // pred_fallthru
          _
        // Predicated region
        $region17: #{tpu_custom_call.1} parent=11 // pred_check
          %p212 = pneg %p130
        $region18: #{tpu_custom_call.1} parent=11 // pred_check_branch
          %214 = sbr.rel (%p212) target = $region20
        $region19: #{tpu_custom_call.1} parent=11 // pred_region
          _
        $region20: #{tpu_custom_call.1} parent=11 // pred_fallthru
          _
        // Predicated region
        $region21: #{tpu_custom_call.1} parent=11 // pred_check
          %p215 = pneg %p151
        $region22: #{tpu_custom_call.1} parent=11 // pred_check_branch
          %217 = sbr.rel (%p215) target = $region24
        $region23: #{tpu_custom_call.1} parent=11 // pred_region
          %219 = vsyncadd [#allocation9], 0
          %s221 = sshll.u32 %s4, 4
          %s222 = int_to_ptr.hbm [resolvable:$true] %s221
          %s223 = sshll.u32 [#allocation8], 4
          %s224 = int_to_ptr.vmem [resolvable:$true] %s223
          %226 = dma.hbm_to_vmem [thread:$0]  %s222, 32, %s224, [#allocation9]
        $region24: #{tpu_custom_call.1} parent=11 // pred_fallthru
          _
      $region12: #{tpu_custom_call.1} parent=5 // pred_fallthru
        _
      %p227 = scmp.lt.s32.totalorder %s19, 3
      // Predicated region
      $region25: #{tpu_custom_call.1} parent=5 // pred_check
        %p228 = pneg %p227
      $region26: #{tpu_custom_call.1} parent=5 // pred_check_branch
        %230 = sbr.rel (%p228) target = $region28
      $region27: #{tpu_custom_call.1} parent=5 // pred_region
        // Predicated region
        $region29: #{tpu_custom_call.1} parent=27 // pred_check
          %p231 = pneg %p77
        $region30: #{tpu_custom_call.1} parent=27 // pred_check_branch
          %233 = sbr.rel (%p231) target = $region32
        $region31: #{tpu_custom_call.1} parent=27 // pred_region
          %s234 = sand.u32 %s19, 1
          %s235 = scalar_lea.sflag [#allocation6], %s234
          %s236 = sand.u32 %s67, 1
          %s237 = smul.addr %s236, 512
          %s238 = scalar_lea.vmem [#allocation5], %s237
          %s239 = smul.u32 32, %s26
          %241 = vsyncadd %s235, 0
          %s242 = smul.addr %s239, 2
          %s243 = smul.addr %s242, 8
          %s244 = scalar_lea.hbm %s1, %s243
          %s245 = sshll.u32 %s244, 4
          %s246 = int_to_ptr.hbm [resolvable:$true] %s245
          %s247 = sshll.u32 %s238, 4
          %s248 = int_to_ptr.vmem [resolvable:$true] %s247
          %253 = dma.hbm_to_vmem [thread:$0]  %s246, 8192, %s248, %s235, 256, 256, 16
        $region32: #{tpu_custom_call.1} parent=27 // pred_fallthru
          _
        // Predicated region
        $region33: #{tpu_custom_call.1} parent=27 // pred_check
          %p254 = pneg %p103
        $region34: #{tpu_custom_call.1} parent=27 // pred_check_branch
          %256 = sbr.rel (%p254) target = $region36
        $region35: #{tpu_custom_call.1} parent=27 // pred_region
          %s257 = sand.u32 %s19, 1
          %s258 = scalar_lea.sflag [#allocation6], %s257
          %s259 = sand.u32 %s93, 1
          %s260 = smul.addr %s259, 2
          %s261 = scalar_lea.vmem [#allocation7], %s260
          %s262 = smul.u32 2, %s26
          %264 = vsyncadd %s258, 0
          %s265 = scalar_lea.hbm %s2, %s262
          %s267 = sshll.u32 %s265, 4
          %s268 = int_to_ptr.hbm [resolvable:$true] %s267
          %s269 = sshll.u32 %s261, 4
          %s270 = int_to_ptr.vmem [resolvable:$true] %s269
          %272 = dma.hbm_to_vmem [thread:$0]  %s268, 32, %s270, %s258
        $region36: #{tpu_custom_call.1} parent=27 // pred_fallthru
          _
      $region28: #{tpu_custom_call.1} parent=5 // pred_fallthru
        _
      %p273 = scmp.le.s32.totalorder 1, %s19
      %p274 = scmp.lt.s32.totalorder %s19, 4
      %p275 = pnand %p273, %p274
      %p276 = pneg %p275
      // Predicated region
      $region37: #{tpu_custom_call.1} parent=5 // pred_check
        _
      $region38: #{tpu_custom_call.1} parent=5 // pred_check_branch
        %278 = sbr.rel (%p275) target = $region40
      $region39: #{tpu_custom_call.1} parent=5 // pred_region
        %s279 = ssub.s32 %s19, 1
        // Predicated region
        $region41: #{tpu_custom_call.1} parent=39 // pred_check
          %p280 = pneg %p57
        $region42: #{tpu_custom_call.1} parent=39 // pred_check_branch
          %282 = sbr.rel (%p280) target = $region44
        $region43: #{tpu_custom_call.1} parent=39 // pred_region
          %284 = dma.done [#allocation3], 4096
        $region44: #{tpu_custom_call.1} parent=39 // pred_fallthru
          _
        %s285 = sand.u32 %s24, 1
        %s286 = scalar_lea.sflag [#allocation6], %s285
        %s287 = sand.u32 %s70, 1
        %s288 = smul.addr %s287, 512
        %s289 = scalar_lea.vmem [#allocation5], %s288
        // Predicated region
        $region45: #{tpu_custom_call.1} parent=39 // pred_check
          %p290 = pneg %p83
        $region46: #{tpu_custom_call.1} parent=39 // pred_check_branch
          %292 = sbr.rel (%p290) target = $region48
        $region47: #{tpu_custom_call.1} parent=39 // pred_region
          %294 = dma.done %s286, 8192
        $region48: #{tpu_custom_call.1} parent=39 // pred_fallthru
          _
        %s295 = sand.u32 %s24, 1
        %s296 = scalar_lea.sflag [#allocation6], %s295
        %s297 = sand.u32 %s96, 1
        %s298 = smul.addr %s297, 2
        %s299 = scalar_lea.vmem [#allocation7], %s298
        // Predicated region
        $region49: #{tpu_custom_call.1} parent=39 // pred_check
          %p300 = pneg %p109
        $region50: #{tpu_custom_call.1} parent=39 // pred_check_branch
          %302 = sbr.rel (%p300) target = $region52
        $region51: #{tpu_custom_call.1} parent=39 // pred_region
          %304 = dma.done %s296, 32
        $region52: #{tpu_custom_call.1} parent=39 // pred_fallthru
          _
        // Predicated region
        $region53: #{tpu_custom_call.1} parent=39 // pred_check
          %p305 = pneg %p151
        $region54: #{tpu_custom_call.1} parent=39 // pred_check_branch
          %307 = sbr.rel (%p305) target = $region56
        $region55: #{tpu_custom_call.1} parent=39 // pred_region
          %309 = dma.done [#allocation9], 32
        $region56: #{tpu_custom_call.1} parent=39 // pred_fallthru
          _
        %p310 = pneg %p57
        %p311 = pneg %p54
        %s312 = sand.u32 %s24, 1
        %s313 = scalar_lea.sflag [#allocation6], %s312
        %s314 = sand.u32 %s70, 1
        %s315 = smul.addr %s314, 512
        %s316 = scalar_lea.vmem [#allocation5], %s315
        %p317 = pneg %p83
        %p318 = pneg %p80
        %s319 = sand.u32 %s24, 1
        %s320 = scalar_lea.sflag [#allocation6], %s319
        %s321 = sand.u32 %s96, 1
        %s322 = smul.addr %s321, 2
        %s323 = scalar_lea.vmem [#allocation7], %s322
        %p324 = pneg %p109
        %p325 = pneg %p106
        %p326 = pneg %p130
        %p327 = pneg %p127
        %p328 = pneg %p151
        %p329 = pneg %p148
        %p330 = pneg %p179
        %p331 = pneg %p176
        %s332 = sand.u32 %s166, 1
        %s333 = scalar_lea.sflag [#allocation4], %s332
        %s334 = sand.u32 %s166, 1
        %s335 = smul.addr %s334, 256
        %s336 = scalar_lea.vmem [#allocation10], %s335
        %s337 = smul.u32 16, %s29
        %s338 = smul.u32 32, %s28
        %s339 = smul.u32 2, %s28
        %s340 = smul.u32 16, %s29
        %s341 = smul.u32 2, %s28
        %v342 = vld [vmem:[#allocation2] sm:$0xff]
        %v343 = vld [vmem:[#allocation2 + $0x8] sm:$0xff]
        %v344 = vld [vmem:[#allocation2 + $0x10] sm:$0xff]
        %v345 = vld [vmem:[#allocation2 + $0x18] sm:$0xff]
        %v346 = vld [vmem:[#allocation2 + $0x20] sm:$0xff]
        %v347 = vld [vmem:[#allocation2 + $0x28] sm:$0xff]
        %v348 = vld [vmem:[#allocation2 + $0x30] sm:$0xff]
        %v349 = vld [vmem:[#allocation2 + $0x38] sm:$0xff]
        %v350 = vld [vmem:[#allocation2 + $0x40] sm:$0xff]
        %v351 = vld [vmem:[#allocation2 + $0x48] sm:$0xff]
        %v352 = vld [vmem:[#allocation2 + $0x50] sm:$0xff]
        %v353 = vld [vmem:[#allocation2 + $0x58] sm:$0xff]
        %v354 = vld [vmem:[#allocation2 + $0x60] sm:$0xff]
        %v355 = vld [vmem:[#allocation2 + $0x68] sm:$0xff]
        %v356 = vld [vmem:[#allocation2 + $0x70] sm:$0xff]
        %v357 = vld [vmem:[#allocation2 + $0x78] sm:$0xff]
        %v358 = vld [vmem:[#allocation2 + $0x80] sm:$0xff]
        %v359 = vld [vmem:[#allocation2 + $0x88] sm:$0xff]
        %v360 = vld [vmem:[#allocation2 + $0x90] sm:$0xff]
        %v361 = vld [vmem:[#allocation2 + $0x98] sm:$0xff]
        %v362 = vld [vmem:[#allocation2 + $0xa0] sm:$0xff]
        %v363 = vld [vmem:[#allocation2 + $0xa8] sm:$0xff]
        %v364 = vld [vmem:[#allocation2 + $0xb0] sm:$0xff]
        %v365 = vld [vmem:[#allocation2 + $0xb8] sm:$0xff]
        %v366 = vld [vmem:[#allocation2 + $0xc0] sm:$0xff]
        %v367 = vld [vmem:[#allocation2 + $0xc8] sm:$0xff]
        %v368 = vld [vmem:[#allocation2 + $0xd0] sm:$0xff]
        %v369 = vld [vmem:[#allocation2 + $0xd8] sm:$0xff]
        %v370 = vld [vmem:[#allocation2 + $0xe0] sm:$0xff]
        %v371 = vld [vmem:[#allocation2 + $0xe8] sm:$0xff]
        %v372 = vld [vmem:[#allocation2 + $0xf0] sm:$0xff]
        %v373 = vld [vmem:[#allocation2 + $0xf8] sm:$0xff]
        %v374 = vadd.f32 %v342, %v343
        %375 = vadd.xlane.f32.xlu0 %v374
        %v376 = vpop.xlane.xlu0 %375
        %v377 = vadd.f32 %v344, %v345
        %378 = vadd.xlane.f32.xlu0 %v377
        %v379 = vpop.xlane.xlu0 %378
        %v380 = vadd.f32 %v346, %v347
        %381 = vadd.xlane.f32.xlu0 %v380
        %v382 = vpop.xlane.xlu0 %381
        %v383 = vadd.f32 %v348, %v349
        %384 = vadd.xlane.f32.xlu0 %v383
        %v385 = vpop.xlane.xlu0 %384
        %v386 = vadd.f32 %v350, %v351
        %387 = vadd.xlane.f32.xlu0 %v386
        %v388 = vpop.xlane.xlu0 %387
        %v389 = vadd.f32 %v352, %v353
        %390 = vadd.xlane.f32.xlu0 %v389
        %v391 = vpop.xlane.xlu0 %390
        %v392 = vadd.f32 %v354, %v355
        %393 = vadd.xlane.f32.xlu0 %v392
        %v394 = vpop.xlane.xlu0 %393
        %v395 = vadd.f32 %v356, %v357
        %396 = vadd.xlane.f32.xlu0 %v395
        %v397 = vpop.xlane.xlu0 %396
        %v398 = vadd.f32 %v358, %v359
        %399 = vadd.xlane.f32.xlu0 %v398
        %v400 = vpop.xlane.xlu0 %399
        %v401 = vadd.f32 %v360, %v361
        %402 = vadd.xlane.f32.xlu0 %v401
        %v403 = vpop.xlane.xlu0 %402
        %v404 = vadd.f32 %v362, %v363
        %405 = vadd.xlane.f32.xlu0 %v404
        %v406 = vpop.xlane.xlu0 %405
        %v407 = vadd.f32 %v364, %v365
        %408 = vadd.xlane.f32.xlu0 %v407
        %v409 = vpop.xlane.xlu0 %408
        %v410 = vadd.f32 %v366, %v367
        %411 = vadd.xlane.f32.xlu0 %v410
        %v412 = vpop.xlane.xlu0 %411
        %v413 = vadd.f32 %v368, %v369
        %414 = vadd.xlane.f32.xlu0 %v413
        %v415 = vpop.xlane.xlu0 %414
        %v416 = vadd.f32 %v370, %v371
        %417 = vadd.xlane.f32.xlu0 %v416
        %v418 = vpop.xlane.xlu0 %417
        %v419 = vadd.f32 %v372, %v373
        %420 = vadd.xlane.f32.xlu0 %v419
        %v421 = vpop.xlane.xlu0 %420
        %v422 = vrcp.pop 256.0
        %v423 = vmul.f32 256.0, %v422
        %v424 = vsub.f32 1.0, %v423
        %v425 = vmul.f32 %v422, %v424
        %v426 = vadd.f32 %v422, %v425
        %vm427 = vweird.f32 %v422
        %v428 = vsel %vm427, %v422, %v426
        %v429 = vmul.f32 %v376, %v428
        %v430 = vmul.f32 %v379, %v428
        %v431 = vmul.f32 %v382, %v428
        %v432 = vmul.f32 %v385, %v428
        %v433 = vmul.f32 %v388, %v428
        %v434 = vmul.f32 %v391, %v428
        %v435 = vmul.f32 %v394, %v428
        %v436 = vmul.f32 %v397, %v428
        %v437 = vmul.f32 %v400, %v428
        %v438 = vmul.f32 %v403, %v428
        %v439 = vmul.f32 %v406, %v428
        %v440 = vmul.f32 %v409, %v428
        %v441 = vmul.f32 %v412, %v428
        %v442 = vmul.f32 %v415, %v428
        %v443 = vmul.f32 %v418, %v428
        %v444 = vmul.f32 %v421, %v428
        %v445 = vsub.f32 %v342, %v429
        %v446 = vsub.f32 %v343, %v429
        %v447 = vsub.f32 %v344, %v430
        %v448 = vsub.f32 %v345, %v430
        %v449 = vsub.f32 %v346, %v431
        %v450 = vsub.f32 %v347, %v431
        %v451 = vsub.f32 %v348, %v432
        %v452 = vsub.f32 %v349, %v432
        %v453 = vsub.f32 %v350, %v433
        %v454 = vsub.f32 %v351, %v433
        %v455 = vsub.f32 %v352, %v434
        %v456 = vsub.f32 %v353, %v434
        %v457 = vsub.f32 %v354, %v435
        %v458 = vsub.f32 %v355, %v435
        %v459 = vsub.f32 %v356, %v436
        %v460 = vsub.f32 %v357, %v436
        %v461 = vsub.f32 %v358, %v437
        %v462 = vsub.f32 %v359, %v437
        %v463 = vsub.f32 %v360, %v438
        %v464 = vsub.f32 %v361, %v438
        %v465 = vsub.f32 %v362, %v439
        %v466 = vsub.f32 %v363, %v439
        %v467 = vsub.f32 %v364, %v440
        %v468 = vsub.f32 %v365, %v440
        %v469 = vsub.f32 %v366, %v441
        %v470 = vsub.f32 %v367, %v441
        %v471 = vsub.f32 %v368, %v442
        %v472 = vsub.f32 %v369, %v442
        %v473 = vsub.f32 %v370, %v443
        %v474 = vsub.f32 %v371, %v443
        %v475 = vsub.f32 %v372, %v444
        %v476 = vsub.f32 %v373, %v444
        %v477 = vmul.f32 %v445, %v445
        %v478 = vmul.f32 %v446, %v446
        %v479 = vmul.f32 %v447, %v447
        %v480 = vmul.f32 %v448, %v448
        %v481 = vmul.f32 %v449, %v449
        %v482 = vmul.f32 %v450, %v450
        %v483 = vmul.f32 %v451, %v451
        %v484 = vmul.f32 %v452, %v452
        %v485 = vmul.f32 %v453, %v453
        %v486 = vmul.f32 %v454, %v454
        %v487 = vmul.f32 %v455, %v455
        %v488 = vmul.f32 %v456, %v456
        %v489 = vmul.f32 %v457, %v457
        %v490 = vmul.f32 %v458, %v458
        %v491 = vmul.f32 %v459, %v459
        %v492 = vmul.f32 %v460, %v460
        %v493 = vmul.f32 %v461, %v461
        %v494 = vmul.f32 %v462, %v462
        %v495 = vmul.f32 %v463, %v463
        %v496 = vmul.f32 %v464, %v464
        %v497 = vmul.f32 %v465, %v465
        %v498 = vmul.f32 %v466, %v466
        %v499 = vmul.f32 %v467, %v467
        %v500 = vmul.f32 %v468, %v468
        %v501 = vmul.f32 %v469, %v469
        %v502 = vmul.f32 %v470, %v470
        %v503 = vmul.f32 %v471, %v471
        %v504 = vmul.f32 %v472, %v472
        %v505 = vmul.f32 %v473, %v473
        %v506 = vmul.f32 %v474, %v474
        %v507 = vmul.f32 %v475, %v475
        %v508 = vmul.f32 %v476, %v476
        %v509 = vadd.f32 %v477, %v478
        %510 = vadd.xlane.f32.xlu0 %v509
        %v511 = vpop.xlane.xlu0 %510
        %v512 = vadd.f32 %v479, %v480
        %513 = vadd.xlane.f32.xlu0 %v512
        %v514 = vpop.xlane.xlu0 %513
        %v515 = vadd.f32 %v481, %v482
        %516 = vadd.xlane.f32.xlu0 %v515
        %v517 = vpop.xlane.xlu0 %516
        %v518 = vadd.f32 %v483, %v484
        %519 = vadd.xlane.f32.xlu0 %v518
        %v520 = vpop.xlane.xlu0 %519
        %v521 = vadd.f32 %v485, %v486
        %522 = vadd.xlane.f32.xlu0 %v521
        %v523 = vpop.xlane.xlu0 %522
        %v524 = vadd.f32 %v487, %v488
        %525 = vadd.xlane.f32.xlu0 %v524
        %v526 = vpop.xlane.xlu0 %525
        %v527 = vadd.f32 %v489, %v490
        %528 = vadd.xlane.f32.xlu0 %v527
        %v529 = vpop.xlane.xlu0 %528
        %v530 = vadd.f32 %v491, %v492
        %531 = vadd.xlane.f32.xlu0 %v530
        %v532 = vpop.xlane.xlu0 %531
        %v533 = vadd.f32 %v493, %v494
        %534 = vadd.xlane.f32.xlu0 %v533
        %v535 = vpop.xlane.xlu0 %534
        %v536 = vadd.f32 %v495, %v496
        %537 = vadd.xlane.f32.xlu0 %v536
        %v538 = vpop.xlane.xlu0 %537
        %v539 = vadd.f32 %v497, %v498
        %540 = vadd.xlane.f32.xlu0 %v539
        %v541 = vpop.xlane.xlu0 %540
        %v542 = vadd.f32 %v499, %v500
        %543 = vadd.xlane.f32.xlu0 %v542
        %v544 = vpop.xlane.xlu0 %543
        %v545 = vadd.f32 %v501, %v502
        %546 = vadd.xlane.f32.xlu0 %v545
        %v547 = vpop.xlane.xlu0 %546
        %v548 = vadd.f32 %v503, %v504
        %549 = vadd.xlane.f32.xlu0 %v548
        %v550 = vpop.xlane.xlu0 %549
        %v551 = vadd.f32 %v505, %v506
        %552 = vadd.xlane.f32.xlu0 %v551
        %v553 = vpop.xlane.xlu0 %552
        %v554 = vadd.f32 %v507, %v508
        %555 = vadd.xlane.f32.xlu0 %v554
        %v556 = vpop.xlane.xlu0 %555
        %v557 = vmul.f32 %v511, %v428
        %v558 = vmul.f32 %v514, %v428
        %v559 = vmul.f32 %v517, %v428
        %v560 = vmul.f32 %v520, %v428
        %v561 = vmul.f32 %v523, %v428
        %v562 = vmul.f32 %v526, %v428
        %v563 = vmul.f32 %v529, %v428
        %v564 = vmul.f32 %v532, %v428
        %v565 = vmul.f32 %v535, %v428
        %v566 = vmul.f32 %v538, %v428
        %v567 = vmul.f32 %v541, %v428
        %v568 = vmul.f32 %v544, %v428
        %v569 = vmul.f32 %v547, %v428
        %v570 = vmul.f32 %v550, %v428
        %v571 = vmul.f32 %v553, %v428
        %v572 = vmul.f32 %v556, %v428
        %v573 = vadd.f32 %v557, 1e-05
        %v574 = vadd.f32 %v558, 1e-05
        %v575 = vadd.f32 %v559, 1e-05
        %v576 = vadd.f32 %v560, 1e-05
        %v577 = vadd.f32 %v561, 1e-05
        %v578 = vadd.f32 %v562, 1e-05
        %v579 = vadd.f32 %v563, 1e-05
        %v580 = vadd.f32 %v564, 1e-05
        %v581 = vadd.f32 %v565, 1e-05
        %v582 = vadd.f32 %v566, 1e-05
        %v583 = vadd.f32 %v567, 1e-05
        %v584 = vadd.f32 %v568, 1e-05
        %v585 = vadd.f32 %v569, 1e-05
        %v586 = vadd.f32 %v570, 1e-05
        %v587 = vadd.f32 %v571, 1e-05
        %v588 = vadd.f32 %v572, 1e-05
        %v589 = vrsqrt.pop %v573
        %v590 = vmul.f32 %v589, %v573
        %v591 = vmul.f32 %v590, %v589
        %v592 = vmul.f32 0.5, %v591
        %v593 = vsub.f32 1.5, %v592
        %v594 = vmul.f32 %v589, %v593
        %vm595 = vweird.f32 %v573
        %vm596 = vweird.f32 %v589
        %vm597 = vmor %vm595, %vm596
        %v598 = vsel %vm597, %v589, %v594
        %v599 = vrsqrt.pop %v574
        %v600 = vmul.f32 %v599, %v574
        %v601 = vmul.f32 %v600, %v599
        %v602 = vmul.f32 0.5, %v601
        %v603 = vsub.f32 1.5, %v602
        %v604 = vmul.f32 %v599, %v603
        %vm605 = vweird.f32 %v574
        %vm606 = vweird.f32 %v599
        %vm607 = vmor %vm605, %vm606
        %v608 = vsel %vm607, %v599, %v604
        %v609 = vrsqrt.pop %v575
        %v610 = vmul.f32 %v609, %v575
        %v611 = vmul.f32 %v610, %v609
        %v612 = vmul.f32 0.5, %v611
        %v613 = vsub.f32 1.5, %v612
        %v614 = vmul.f32 %v609, %v613
        %vm615 = vweird.f32 %v575
        %vm616 = vweird.f32 %v609
        %vm617 = vmor %vm615, %vm616
        %v618 = vsel %vm617, %v609, %v614
        %v619 = vrsqrt.pop %v576
        %v620 = vmul.f32 %v619, %v576
        %v621 = vmul.f32 %v620, %v619
        %v622 = vmul.f32 0.5, %v621
        %v623 = vsub.f32 1.5, %v622
        %v624 = vmul.f32 %v619, %v623
        %vm625 = vweird.f32 %v576
        %vm626 = vweird.f32 %v619
        %vm627 = vmor %vm625, %vm626
        %v628 = vsel %vm627, %v619, %v624
        %v629 = vrsqrt.pop %v577
        %v630 = vmul.f32 %v629, %v577
        %v631 = vmul.f32 %v630, %v629
        %v632 = vmul.f32 0.5, %v631
        %v633 = vsub.f32 1.5, %v632
        %v634 = vmul.f32 %v629, %v633
        %vm635 = vweird.f32 %v577
        %vm636 = vweird.f32 %v629
        %vm637 = vmor %vm635, %vm636
        %v638 = vsel %vm637, %v629, %v634
        %v639 = vrsqrt.pop %v578
        %v640 = vmul.f32 %v639, %v578
        %v641 = vmul.f32 %v640, %v639
        %v642 = vmul.f32 0.5, %v641
        %v643 = vsub.f32 1.5, %v642
        %v644 = vmul.f32 %v639, %v643
        %vm645 = vweird.f32 %v578
        %vm646 = vweird.f32 %v639
        %vm647 = vmor %vm645, %vm646
        %v648 = vsel %vm647, %v639, %v644
        %v649 = vrsqrt.pop %v579
        %v650 = vmul.f32 %v649, %v579
        %v651 = vmul.f32 %v650, %v649
        %v652 = vmul.f32 0.5, %v651
        %v653 = vsub.f32 1.5, %v652
        %v654 = vmul.f32 %v649, %v653
        %vm655 = vweird.f32 %v579
        %vm656 = vweird.f32 %v649
        %vm657 = vmor %vm655, %vm656
        %v658 = vsel %vm657, %v649, %v654
        %v659 = vrsqrt.pop %v580
        %v660 = vmul.f32 %v659, %v580
        %v661 = vmul.f32 %v660, %v659
        %v662 = vmul.f32 0.5, %v661
        %v663 = vsub.f32 1.5, %v662
        %v664 = vmul.f32 %v659, %v663
        %vm665 = vweird.f32 %v580
        %vm666 = vweird.f32 %v659
        %vm667 = vmor %vm665, %vm666
        %v668 = vsel %vm667, %v659, %v664
        %v669 = vrsqrt.pop %v581
        %v670 = vmul.f32 %v669, %v581
        %v671 = vmul.f32 %v670, %v669
        %v672 = vmul.f32 0.5, %v671
        %v673 = vsub.f32 1.5, %v672
        %v674 = vmul.f32 %v669, %v673
        %vm675 = vweird.f32 %v581
        %vm676 = vweird.f32 %v669
        %vm677 = vmor %vm675, %vm676
        %v678 = vsel %vm677, %v669, %v674
        %v679 = vrsqrt.pop %v582
        %v680 = vmul.f32 %v679, %v582
        %v681 = vmul.f32 %v680, %v679
        %v682 = vmul.f32 0.5, %v681
        %v683 = vsub.f32 1.5, %v682
        %v684 = vmul.f32 %v679, %v683
        %vm685 = vweird.f32 %v582
        %vm686 = vweird.f32 %v679
        %vm687 = vmor %vm685, %vm686
        %v688 = vsel %vm687, %v679, %v684
        %v689 = vrsqrt.pop %v583
        %v690 = vmul.f32 %v689, %v583
        %v691 = vmul.f32 %v690, %v689
        %v692 = vmul.f32 0.5, %v691
        %v693 = vsub.f32 1.5, %v692
        %v694 = vmul.f32 %v689, %v693
        %vm695 = vweird.f32 %v583
        %vm696 = vweird.f32 %v689
        %vm697 = vmor %vm695, %vm696
        %v698 = vsel %vm697, %v689, %v694
        %v699 = vrsqrt.pop %v584
        %v700 = vmul.f32 %v699, %v584
        %v701 = vmul.f32 %v700, %v699
        %v702 = vmul.f32 0.5, %v701
        %v703 = vsub.f32 1.5, %v702
        %v704 = vmul.f32 %v699, %v703
        %vm705 = vweird.f32 %v584
        %vm706 = vweird.f32 %v699
        %vm707 = vmor %vm705, %vm706
        %v708 = vsel %vm707, %v699, %v704
        %v709 = vrsqrt.pop %v585
        %v710 = vmul.f32 %v709, %v585
        %v711 = vmul.f32 %v710, %v709
        %v712 = vmul.f32 0.5, %v711
        %v713 = vsub.f32 1.5, %v712
        %v714 = vmul.f32 %v709, %v713
        %vm715 = vweird.f32 %v585
        %vm716 = vweird.f32 %v709
        %vm717 = vmor %vm715, %vm716
        %v718 = vsel %vm717, %v709, %v714
        %v719 = vrsqrt.pop %v586
        %v720 = vmul.f32 %v719, %v586
        %v721 = vmul.f32 %v720, %v719
        %v722 = vmul.f32 0.5, %v721
        %v723 = vsub.f32 1.5, %v722
        %v724 = vmul.f32 %v719, %v723
        %vm725 = vweird.f32 %v586
        %vm726 = vweird.f32 %v719
        %vm727 = vmor %vm725, %vm726
        %v728 = vsel %vm727, %v719, %v724
        %v729 = vrsqrt.pop %v587
        %v730 = vmul.f32 %v729, %v587
        %v731 = vmul.f32 %v730, %v729
        %v732 = vmul.f32 0.5, %v731
        %v733 = vsub.f32 1.5, %v732
        %v734 = vmul.f32 %v729, %v733
        %vm735 = vweird.f32 %v587
        %vm736 = vweird.f32 %v729
        %vm737 = vmor %vm735, %vm736
        %v738 = vsel %vm737, %v729, %v734
        %v739 = vrsqrt.pop %v588
        %v740 = vmul.f32 %v739, %v588
        %v741 = vmul.f32 %v740, %v739
        %v742 = vmul.f32 0.5, %v741
        %v743 = vsub.f32 1.5, %v742
        %v744 = vmul.f32 %v739, %v743
        %vm745 = vweird.f32 %v588
        %vm746 = vweird.f32 %v739
        %vm747 = vmor %vm745, %vm746
        %v748 = vsel %vm747, %v739, %v744
        %v749 = vmul.f32 %v445, %v598
        %v750 = vmul.f32 %v446, %v598
        %v751 = vmul.f32 %v447, %v608
        %v752 = vmul.f32 %v448, %v608
        %v753 = vmul.f32 %v449, %v618
        %v754 = vmul.f32 %v450, %v618
        %v755 = vmul.f32 %v451, %v628
        %v756 = vmul.f32 %v452, %v628
        %v757 = vmul.f32 %v453, %v638
        %v758 = vmul.f32 %v454, %v638
        %v759 = vmul.f32 %v455, %v648
        %v760 = vmul.f32 %v456, %v648
        %v761 = vmul.f32 %v457, %v658
        %v762 = vmul.f32 %v458, %v658
        %v763 = vmul.f32 %v459, %v668
        %v764 = vmul.f32 %v460, %v668
        %v765 = vmul.f32 %v461, %v678
        %v766 = vmul.f32 %v462, %v678
        %v767 = vmul.f32 %v463, %v688
        %v768 = vmul.f32 %v464, %v688
        %v769 = vmul.f32 %v465, %v698
        %v770 = vmul.f32 %v466, %v698
        %v771 = vmul.f32 %v467, %v708
        %v772 = vmul.f32 %v468, %v708
        %v773 = vmul.f32 %v469, %v718
        %v774 = vmul.f32 %v470, %v718
        %v775 = vmul.f32 %v471, %v728
        %v776 = vmul.f32 %v472, %v728
        %v777 = vmul.f32 %v473, %v738
        %v778 = vmul.f32 %v474, %v738
        %v779 = vmul.f32 %v475, %v748
        %v780 = vmul.f32 %v476, %v748
        %v781 = vld [vmem:[%s3] sm:$0x3]
        %v783 = vperm.slane %v781, 0
        %v784 = vperm.slane %v781, 1
        %v787 = vmul.f32 %v749, %v783
        %v788 = vmul.f32 %v750, %v784
        %v789 = vmul.f32 %v751, %v783
        %v790 = vmul.f32 %v752, %v784
        %v791 = vmul.f32 %v753, %v783
        %v792 = vmul.f32 %v754, %v784
        %v793 = vmul.f32 %v755, %v783
        %v794 = vmul.f32 %v756, %v784
        %v795 = vmul.f32 %v757, %v783
        %v796 = vmul.f32 %v758, %v784
        %v797 = vmul.f32 %v759, %v783
        %v798 = vmul.f32 %v760, %v784
        %v799 = vmul.f32 %v761, %v783
        %v800 = vmul.f32 %v762, %v784
        %v801 = vmul.f32 %v763, %v783
        %v802 = vmul.f32 %v764, %v784
        %v803 = vmul.f32 %v765, %v783
        %v804 = vmul.f32 %v766, %v784
        %v805 = vmul.f32 %v767, %v783
        %v806 = vmul.f32 %v768, %v784
        %v807 = vmul.f32 %v769, %v783
        %v808 = vmul.f32 %v770, %v784
        %v809 = vmul.f32 %v771, %v783
        %v810 = vmul.f32 %v772, %v784
        %v811 = vmul.f32 %v773, %v783
        %v812 = vmul.f32 %v774, %v784
        %v813 = vmul.f32 %v775, %v783
        %v814 = vmul.f32 %v776, %v784
        %v815 = vmul.f32 %v777, %v783
        %v816 = vmul.f32 %v778, %v784
        %v817 = vmul.f32 %v779, %v783
        %v818 = vmul.f32 %v780, %v784
        %v819 = vld [vmem:[#allocation8] sm:$0x3]
        %v821 = vperm.slane %v819, 0
        %v822 = vperm.slane %v819, 1
        %v825 = vadd.f32 %v787, %v821
        %v826 = vadd.f32 %v788, %v822
        %v827 = vadd.f32 %v789, %v821
        %v828 = vadd.f32 %v790, %v822
        %v829 = vadd.f32 %v791, %v821
        %v830 = vadd.f32 %v792, %v822
        %v831 = vadd.f32 %v793, %v821
        %v832 = vadd.f32 %v794, %v822
        %v833 = vadd.f32 %v795, %v821
        %v834 = vadd.f32 %v796, %v822
        %v835 = vadd.f32 %v797, %v821
        %v836 = vadd.f32 %v798, %v822
        %v837 = vadd.f32 %v799, %v821
        %v838 = vadd.f32 %v800, %v822
        %v839 = vadd.f32 %v801, %v821
        %v840 = vadd.f32 %v802, %v822
        %v841 = vadd.f32 %v803, %v821
        %v842 = vadd.f32 %v804, %v822
        %v843 = vadd.f32 %v805, %v821
        %v844 = vadd.f32 %v806, %v822
        %v845 = vadd.f32 %v807, %v821
        %v846 = vadd.f32 %v808, %v822
        %v847 = vadd.f32 %v809, %v821
        %v848 = vadd.f32 %v810, %v822
        %v849 = vadd.f32 %v811, %v821
        %v850 = vadd.f32 %v812, %v822
        %v851 = vadd.f32 %v813, %v821
        %v852 = vadd.f32 %v814, %v822
        %v853 = vadd.f32 %v815, %v821
        %v854 = vadd.f32 %v816, %v822
        %v855 = vadd.f32 %v817, %v821
        %v856 = vadd.f32 %v818, %v822
        %v857 = vld [vmem:[%s289] sm:$0xff]
        %v858 = vld [vmem:[%s289 + $0x8] sm:$0xff]
        %v859 = vld [vmem:[%s289 + $0x10] sm:$0xff]
        %v860 = vld [vmem:[%s289 + $0x18] sm:$0xff]
        %v861 = vld [vmem:[%s289 + $0x20] sm:$0xff]
        %v862 = vld [vmem:[%s289 + $0x28] sm:$0xff]
        %v863 = vld [vmem:[%s289 + $0x30] sm:$0xff]
        %v864 = vld [vmem:[%s289 + $0x38] sm:$0xff]
        %v865 = vld [vmem:[%s289 + $0x40] sm:$0xff]
        %v866 = vld [vmem:[%s289 + $0x48] sm:$0xff]
        %v867 = vld [vmem:[%s289 + $0x50] sm:$0xff]
        %v868 = vld [vmem:[%s289 + $0x58] sm:$0xff]
        %v869 = vld [vmem:[%s289 + $0x60] sm:$0xff]
        %v870 = vld [vmem:[%s289 + $0x68] sm:$0xff]
        %v871 = vld [vmem:[%s289 + $0x70] sm:$0xff]
        %v872 = vld [vmem:[%s289 + $0x78] sm:$0xff]
        %v873 = vld [vmem:[%s289 + $0x80] sm:$0xff]
        %v874 = vld [vmem:[%s289 + $0x88] sm:$0xff]
        %v875 = vld [vmem:[%s289 + $0x90] sm:$0xff]
        %v876 = vld [vmem:[%s289 + $0x98] sm:$0xff]
        %v877 = vld [vmem:[%s289 + $0xa0] sm:$0xff]
        %v878 = vld [vmem:[%s289 + $0xa8] sm:$0xff]
        %v879 = vld [vmem:[%s289 + $0xb0] sm:$0xff]
        %v880 = vld [vmem:[%s289 + $0xb8] sm:$0xff]
        %v881 = vld [vmem:[%s289 + $0xc0] sm:$0xff]
        %v882 = vld [vmem:[%s289 + $0xc8] sm:$0xff]
        %v883 = vld [vmem:[%s289 + $0xd0] sm:$0xff]
        %v884 = vld [vmem:[%s289 + $0xd8] sm:$0xff]
        %v885 = vld [vmem:[%s289 + $0xe0] sm:$0xff]
        %v886 = vld [vmem:[%s289 + $0xe8] sm:$0xff]
        %v887 = vld [vmem:[%s289 + $0xf0] sm:$0xff]
        %v888 = vld [vmem:[%s289 + $0xf8] sm:$0xff]
        %v889 = vld [vmem:[%s289 + $0x100] sm:$0xff]
        %v890 = vld [vmem:[%s289 + $0x108] sm:$0xff]
        %v891 = vld [vmem:[%s289 + $0x110] sm:$0xff]
        %v892 = vld [vmem:[%s289 + $0x118] sm:$0xff]
        %v893 = vld [vmem:[%s289 + $0x120] sm:$0xff]
        %v894 = vld [vmem:[%s289 + $0x128] sm:$0xff]
        %v895 = vld [vmem:[%s289 + $0x130] sm:$0xff]
        %v896 = vld [vmem:[%s289 + $0x138] sm:$0xff]
        %v897 = vld [vmem:[%s289 + $0x140] sm:$0xff]
        %v898 = vld [vmem:[%s289 + $0x148] sm:$0xff]
        %v899 = vld [vmem:[%s289 + $0x150] sm:$0xff]
        %v900 = vld [vmem:[%s289 + $0x158] sm:$0xff]
        %v901 = vld [vmem:[%s289 + $0x160] sm:$0xff]
        %v902 = vld [vmem:[%s289 + $0x168] sm:$0xff]
        %v903 = vld [vmem:[%s289 + $0x170] sm:$0xff]
        %v904 = vld [vmem:[%s289 + $0x178] sm:$0xff]
        %v905 = vld [vmem:[%s289 + $0x180] sm:$0xff]
        %v906 = vld [vmem:[%s289 + $0x188] sm:$0xff]
        %v907 = vld [vmem:[%s289 + $0x190] sm:$0xff]
        %v908 = vld [vmem:[%s289 + $0x198] sm:$0xff]
        %v909 = vld [vmem:[%s289 + $0x1a0] sm:$0xff]
        %v910 = vld [vmem:[%s289 + $0x1a8] sm:$0xff]
        %v911 = vld [vmem:[%s289 + $0x1b0] sm:$0xff]
        %v912 = vld [vmem:[%s289 + $0x1b8] sm:$0xff]
        %v913 = vld [vmem:[%s289 + $0x1c0] sm:$0xff]
        %v914 = vld [vmem:[%s289 + $0x1c8] sm:$0xff]
        %v915 = vld [vmem:[%s289 + $0x1d0] sm:$0xff]
        %v916 = vld [vmem:[%s289 + $0x1d8] sm:$0xff]
        %v917 = vld [vmem:[%s289 + $0x1e0] sm:$0xff]
        %v918 = vld [vmem:[%s289 + $0x1e8] sm:$0xff]
        %v919 = vld [vmem:[%s289 + $0x1f0] sm:$0xff]
        %v920 = vld [vmem:[%s289 + $0x1f8] sm:$0xff]
        %v921 = vld [vmem:[%s299] sm:$0x3]
        %v923 = vperm.slane %v921, 0
        %v924 = vperm.slane %v921, 1
        %927 = vmatpush.xpose.msra.mxu0 %v887
        %928 = vmatpush.xpose.msra.mxu0 %v885
        %929 = vmatpush.xpose.msra.mxu0 %v883
        %930 = vmatpush.xpose.msra.mxu0 %v881
        %931 = vmatpush.xpose.msra.mxu0 %v879
        %932 = vmatpush.xpose.msra.mxu0 %v877
        %933 = vmatpush.xpose.msra.mxu0 %v875
        %934 = vmatpush.xpose.msra.mxu0 %v873
        %935 = vmatpush.xpose.msra.mxu0 %v871
        %936 = vmatpush.xpose.msra.mxu0 %v869
        %937 = vmatpush.xpose.msra.mxu0 %v867
        %938 = vmatpush.xpose.msra.mxu0 %v865
        %939 = vmatpush.xpose.msra.mxu0 %v863
        %940 = vmatpush.xpose.msra.mxu0 %v861
        %941 = vmatpush.xpose.msra.mxu0 %v859
        %942 = vmatpush.xpose.msra.mxu0 %v857
        %943 = vmatmul.f32.gmra.mxu0 %v825
        %v944 = vpop.f32.mrf.mxu0
        %v945 = vadd.f32 %v923, %v944
        %946 = vmatmul.f32.gmra.mxu0 %v827
        %v947 = vpop.f32.mrf.mxu0
        %v948 = vadd.f32 %v923, %v947
        %949 = vmatmul.f32.gmra.mxu0 %v829
        %v950 = vpop.f32.mrf.mxu0
        %v951 = vadd.f32 %v923, %v950
        %952 = vmatmul.f32.gmra.mxu0 %v831
        %v953 = vpop.f32.mrf.mxu0
        %v954 = vadd.f32 %v923, %v953
        %955 = vmatmul.f32.gmra.mxu0 %v833
        %v956 = vpop.f32.mrf.mxu0
        %v957 = vadd.f32 %v923, %v956
        %958 = vmatmul.f32.gmra.mxu0 %v835
        %v959 = vpop.f32.mrf.mxu0
        %v960 = vadd.f32 %v923, %v959
        %961 = vmatmul.f32.gmra.mxu0 %v837
        %v962 = vpop.f32.mrf.mxu0
        %v963 = vadd.f32 %v923, %v962
        %964 = vmatmul.f32.gmra.mxu0 %v839
        %v965 = vpop.f32.mrf.mxu0
        %v966 = vadd.f32 %v923, %v965
        %967 = vmatmul.f32.gmra.mxu0 %v841
        %v968 = vpop.f32.mrf.mxu0
        %v969 = vadd.f32 %v923, %v968
        %970 = vmatmul.f32.gmra.mxu0 %v843
        %v971 = vpop.f32.mrf.mxu0
        %v972 = vadd.f32 %v923, %v971
        %973 = vmatmul.f32.gmra.mxu0 %v845
        %v974 = vpop.f32.mrf.mxu0
        %v975 = vadd.f32 %v923, %v974
        %976 = vmatmul.f32.gmra.mxu0 %v847
        %v977 = vpop.f32.mrf.mxu0
        %v978 = vadd.f32 %v923, %v977
        %979 = vmatmul.f32.gmra.mxu0 %v849
        %v980 = vpop.f32.mrf.mxu0
        %v981 = vadd.f32 %v923, %v980
        %982 = vmatmul.f32.gmra.mxu0 %v851
        %v983 = vpop.f32.mrf.mxu0
        %v984 = vadd.f32 %v923, %v983
        %985 = vmatmul.f32.gmra.mxu0 %v853
        %v986 = vpop.f32.mrf.mxu0
        %v987 = vadd.f32 %v923, %v986
        %988 = vmatmul.f32.gmra.mxu0 %v855
        %v989 = vpop.f32.mrf.mxu0
        %v990 = vadd.f32 %v923, %v989
        %991 = vdwg.mxu0
        %992 = vmatpush.xpose.msra.mxu0 %v888
        %993 = vmatpush.xpose.msra.mxu0 %v886
        %994 = vmatpush.xpose.msra.mxu0 %v884
        %995 = vmatpush.xpose.msra.mxu0 %v882
        %996 = vmatpush.xpose.msra.mxu0 %v880
        %997 = vmatpush.xpose.msra.mxu0 %v878
        %998 = vmatpush.xpose.msra.mxu0 %v876
        %999 = vmatpush.xpose.msra.mxu0 %v874
        %1000 = vmatpush.xpose.msra.mxu0 %v872
        %1001 = vmatpush.xpose.msra.mxu0 %v870
        %1002 = vmatpush.xpose.msra.mxu0 %v868
        %1003 = vmatpush.xpose.msra.mxu0 %v866
        %1004 = vmatpush.xpose.msra.mxu0 %v864
        %1005 = vmatpush.xpose.msra.mxu0 %v862
        %1006 = vmatpush.xpose.msra.mxu0 %v860
        %1007 = vmatpush.xpose.msra.mxu0 %v858
        %1008 = vmatmul.f32.gmra.mxu0 %v826
        %v1009 = vpop.f32.mrf.mxu0
        %v1010 = vadd.f32 %v945, %v1009
        %1011 = vmatmul.f32.gmra.mxu0 %v828
        %v1012 = vpop.f32.mrf.mxu0
        %v1013 = vadd.f32 %v948, %v1012
        %1014 = vmatmul.f32.gmra.mxu0 %v830
        %v1015 = vpop.f32.mrf.mxu0
        %v1016 = vadd.f32 %v951, %v1015
        %1017 = vmatmul.f32.gmra.mxu0 %v832
        %v1018 = vpop.f32.mrf.mxu0
        %v1019 = vadd.f32 %v954, %v1018
        %1020 = vmatmul.f32.gmra.mxu0 %v834
        %v1021 = vpop.f32.mrf.mxu0
        %v1022 = vadd.f32 %v957, %v1021
        %1023 = vmatmul.f32.gmra.mxu0 %v836
        %v1024 = vpop.f32.mrf.mxu0
        %v1025 = vadd.f32 %v960, %v1024
        %1026 = vmatmul.f32.gmra.mxu0 %v838
        %v1027 = vpop.f32.mrf.mxu0
        %v1028 = vadd.f32 %v963, %v1027
        %1029 = vmatmul.f32.gmra.mxu0 %v840
        %v1030 = vpop.f32.mrf.mxu0
        %v1031 = vadd.f32 %v966, %v1030
        %1032 = vmatmul.f32.gmra.mxu0 %v842
        %v1033 = vpop.f32.mrf.mxu0
        %v1034 = vadd.f32 %v969, %v1033
        %1035 = vmatmul.f32.gmra.mxu0 %v844
        %v1036 = vpop.f32.mrf.mxu0
        %v1037 = vadd.f32 %v972, %v1036
        %1038 = vmatmul.f32.gmra.mxu0 %v846
        %v1039 = vpop.f32.mrf.mxu0
        %v1040 = vadd.f32 %v975, %v1039
        %1041 = vmatmul.f32.gmra.mxu0 %v848
        %v1042 = vpop.f32.mrf.mxu0
        %v1043 = vadd.f32 %v978, %v1042
        %1044 = vmatmul.f32.gmra.mxu0 %v850
        %v1045 = vpop.f32.mrf.mxu0
        %v1046 = vadd.f32 %v981, %v1045
        %1047 = vmatmul.f32.gmra.mxu0 %v852
        %v1048 = vpop.f32.mrf.mxu0
        %v1049 = vadd.f32 %v984, %v1048
        %1050 = vmatmul.f32.gmra.mxu0 %v854
        %v1051 = vpop.f32.mrf.mxu0
        %v1052 = vadd.f32 %v987, %v1051
        %1053 = vmatmul.f32.gmra.mxu0 %v856
        %v1054 = vpop.f32.mrf.mxu0
        %v1055 = vadd.f32 %v990, %v1054
        %1056 = vdwg.mxu0
        %1057 = vmatpush.xpose.msra.mxu0 %v919
        %1058 = vmatpush.xpose.msra.mxu0 %v917
        %1059 = vmatpush.xpose.msra.mxu0 %v915
        %1060 = vmatpush.xpose.msra.mxu0 %v913
        %1061 = vmatpush.xpose.msra.mxu0 %v911
        %1062 = vmatpush.xpose.msra.mxu0 %v909
        %1063 = vmatpush.xpose.msra.mxu0 %v907
        %1064 = vmatpush.xpose.msra.mxu0 %v905
        %1065 = vmatpush.xpose.msra.mxu0 %v903
        %1066 = vmatpush.xpose.msra.mxu0 %v901
        %1067 = vmatpush.xpose.msra.mxu0 %v899
        %1068 = vmatpush.xpose.msra.mxu0 %v897
        %1069 = vmatpush.xpose.msra.mxu0 %v895
        %1070 = vmatpush.xpose.msra.mxu0 %v893
        %1071 = vmatpush.xpose.msra.mxu0 %v891
        %1072 = vmatpush.xpose.msra.mxu0 %v889
        %1073 = vmatmul.f32.gmra.mxu0 %v825
        %v1074 = vpop.f32.mrf.mxu0
        %v1075 = vadd.f32 %v924, %v1074
        %1076 = vmatmul.f32.gmra.mxu0 %v827
        %v1077 = vpop.f32.mrf.mxu0
        %v1078 = vadd.f32 %v924, %v1077
        %1079 = vmatmul.f32.gmra.mxu0 %v829
        %v1080 = vpop.f32.mrf.mxu0
        %v1081 = vadd.f32 %v924, %v1080
        %1082 = vmatmul.f32.gmra.mxu0 %v831
        %v1083 = vpop.f32.mrf.mxu0
        %v1084 = vadd.f32 %v924, %v1083
        %1085 = vmatmul.f32.gmra.mxu0 %v833
        %v1086 = vpop.f32.mrf.mxu0
        %v1087 = vadd.f32 %v924, %v1086
        %1088 = vmatmul.f32.gmra.mxu0 %v835
        %v1089 = vpop.f32.mrf.mxu0
        %v1090 = vadd.f32 %v924, %v1089
        %1091 = vmatmul.f32.gmra.mxu0 %v837
        %v1092 = vpop.f32.mrf.mxu0
        %v1093 = vadd.f32 %v924, %v1092
        %1094 = vmatmul.f32.gmra.mxu0 %v839
        %v1095 = vpop.f32.mrf.mxu0
        %v1096 = vadd.f32 %v924, %v1095
        %1097 = vmatmul.f32.gmra.mxu0 %v841
        %v1098 = vpop.f32.mrf.mxu0
        %v1099 = vadd.f32 %v924, %v1098
        %1100 = vmatmul.f32.gmra.mxu0 %v843
        %v1101 = vpop.f32.mrf.mxu0
        %v1102 = vadd.f32 %v924, %v1101
        %1103 = vmatmul.f32.gmra.mxu0 %v845
        %v1104 = vpop.f32.mrf.mxu0
        %v1105 = vadd.f32 %v924, %v1104
        %1106 = vmatmul.f32.gmra.mxu0 %v847
        %v1107 = vpop.f32.mrf.mxu0
        %v1108 = vadd.f32 %v924, %v1107
        %1109 = vmatmul.f32.gmra.mxu0 %v849
        %v1110 = vpop.f32.mrf.mxu0
        %v1111 = vadd.f32 %v924, %v1110
        %1112 = vmatmul.f32.gmra.mxu0 %v851
        %v1113 = vpop.f32.mrf.mxu0
        %v1114 = vadd.f32 %v924, %v1113
        %1115 = vmatmul.f32.gmra.mxu0 %v853
        %v1116 = vpop.f32.mrf.mxu0
        %v1117 = vadd.f32 %v924, %v1116
        %1118 = vmatmul.f32.gmra.mxu0 %v855
        %v1119 = vpop.f32.mrf.mxu0
        %v1120 = vadd.f32 %v924, %v1119
        %1121 = vdwg.mxu0
        %1122 = vmatpush.xpose.msra.mxu0 %v920
        %1123 = vmatpush.xpose.msra.mxu0 %v918
        %1124 = vmatpush.xpose.msra.mxu0 %v916
        %1125 = vmatpush.xpose.msra.mxu0 %v914
        %1126 = vmatpush.xpose.msra.mxu0 %v912
        %1127 = vmatpush.xpose.msra.mxu0 %v910
        %1128 = vmatpush.xpose.msra.mxu0 %v908
        %1129 = vmatpush.xpose.msra.mxu0 %v906
        %1130 = vmatpush.xpose.msra.mxu0 %v904
        %1131 = vmatpush.xpose.msra.mxu0 %v902
        %1132 = vmatpush.xpose.msra.mxu0 %v900
        %1133 = vmatpush.xpose.msra.mxu0 %v898
        %1134 = vmatpush.xpose.msra.mxu0 %v896
        %1135 = vmatpush.xpose.msra.mxu0 %v894
        %1136 = vmatpush.xpose.msra.mxu0 %v892
        %1137 = vmatpush.xpose.msra.mxu0 %v890
        %1138 = vmatmul.f32.gmra.mxu0 %v826
        %v1139 = vpop.f32.mrf.mxu0
        %v1140 = vadd.f32 %v1075, %v1139
        %1141 = vmatmul.f32.gmra.mxu0 %v828
        %v1142 = vpop.f32.mrf.mxu0
        %v1143 = vadd.f32 %v1078, %v1142
        %1144 = vmatmul.f32.gmra.mxu0 %v830
        %v1145 = vpop.f32.mrf.mxu0
        %v1146 = vadd.f32 %v1081, %v1145
        %1147 = vmatmul.f32.gmra.mxu0 %v832
        %v1148 = vpop.f32.mrf.mxu0
        %v1149 = vadd.f32 %v1084, %v1148
        %1150 = vmatmul.f32.gmra.mxu0 %v834
        %v1151 = vpop.f32.mrf.mxu0
        %v1152 = vadd.f32 %v1087, %v1151
        %1153 = vmatmul.f32.gmra.mxu0 %v836
        %v1154 = vpop.f32.mrf.mxu0
        %v1155 = vadd.f32 %v1090, %v1154
        %1156 = vmatmul.f32.gmra.mxu0 %v838
        %v1157 = vpop.f32.mrf.mxu0
        %v1158 = vadd.f32 %v1093, %v1157
        %1159 = vmatmul.f32.gmra.mxu0 %v840
        %v1160 = vpop.f32.mrf.mxu0
        %v1161 = vadd.f32 %v1096, %v1160
        %1162 = vmatmul.f32.gmra.mxu0 %v842
        %v1163 = vpop.f32.mrf.mxu0
        %v1164 = vadd.f32 %v1099, %v1163
        %1165 = vmatmul.f32.gmra.mxu0 %v844
        %v1166 = vpop.f32.mrf.mxu0
        %v1167 = vadd.f32 %v1102, %v1166
        %1168 = vmatmul.f32.gmra.mxu0 %v846
        %v1169 = vpop.f32.mrf.mxu0
        %v1170 = vadd.f32 %v1105, %v1169
        %1171 = vmatmul.f32.gmra.mxu0 %v848
        %v1172 = vpop.f32.mrf.mxu0
        %v1173 = vadd.f32 %v1108, %v1172
        %1174 = vmatmul.f32.gmra.mxu0 %v850
        %v1175 = vpop.f32.mrf.mxu0
        %v1176 = vadd.f32 %v1111, %v1175
        %1177 = vmatmul.f32.gmra.mxu0 %v852
        %v1178 = vpop.f32.mrf.mxu0
        %v1179 = vadd.f32 %v1114, %v1178
        %1180 = vmatmul.f32.gmra.mxu0 %v854
        %v1181 = vpop.f32.mrf.mxu0
        %v1182 = vadd.f32 %v1117, %v1181
        %1183 = vmatmul.f32.gmra.mxu0 %v856
        %v1184 = vpop.f32.mrf.mxu0
        %v1185 = vadd.f32 %v1120, %v1184
        %1186 = vdwg.mxu0
        %1187 = vst [vmem:[%s336] sm:$0xff] %v1010
        %1188 = vst [vmem:[%s336 + $0x8] sm:$0xff] %v1140
        %1189 = vst [vmem:[%s336 + $0x10] sm:$0xff] %v1013
        %1190 = vst [vmem:[%s336 + $0x18] sm:$0xff] %v1143
        %1191 = vst [vmem:[%s336 + $0x20] sm:$0xff] %v1016
        %1192 = vst [vmem:[%s336 + $0x28] sm:$0xff] %v1146
        %1193 = vst [vmem:[%s336 + $0x30] sm:$0xff] %v1019
        %1194 = vst [vmem:[%s336 + $0x38] sm:$0xff] %v1149
        %1195 = vst [vmem:[%s336 + $0x40] sm:$0xff] %v1022
        %1196 = vst [vmem:[%s336 + $0x48] sm:$0xff] %v1152
        %1197 = vst [vmem:[%s336 + $0x50] sm:$0xff] %v1025
        %1198 = vst [vmem:[%s336 + $0x58] sm:$0xff] %v1155
        %1199 = vst [vmem:[%s336 + $0x60] sm:$0xff] %v1028
        %1200 = vst [vmem:[%s336 + $0x68] sm:$0xff] %v1158
        %1201 = vst [vmem:[%s336 + $0x70] sm:$0xff] %v1031
        %1202 = vst [vmem:[%s336 + $0x78] sm:$0xff] %v1161
        %1203 = vst [vmem:[%s336 + $0x80] sm:$0xff] %v1034
        %1204 = vst [vmem:[%s336 + $0x88] sm:$0xff] %v1164
        %1205 = vst [vmem:[%s336 + $0x90] sm:$0xff] %v1037
        %1206 = vst [vmem:[%s336 + $0x98] sm:$0xff] %v1167
        %1207 = vst [vmem:[%s336 + $0xa0] sm:$0xff] %v1040
        %1208 = vst [vmem:[%s336 + $0xa8] sm:$0xff] %v1170
        %1209 = vst [vmem:[%s336 + $0xb0] sm:$0xff] %v1043
        %1210 = vst [vmem:[%s336 + $0xb8] sm:$0xff] %v1173
        %1211 = vst [vmem:[%s336 + $0xc0] sm:$0xff] %v1046
        %1212 = vst [vmem:[%s336 + $0xc8] sm:$0xff] %v1176
        %1213 = vst [vmem:[%s336 + $0xd0] sm:$0xff] %v1049
        %1214 = vst [vmem:[%s336 + $0xd8] sm:$0xff] %v1179
        %1215 = vst [vmem:[%s336 + $0xe0] sm:$0xff] %v1052
        %1216 = vst [vmem:[%s336 + $0xe8] sm:$0xff] %v1182
        %1217 = vst [vmem:[%s336 + $0xf0] sm:$0xff] %v1055
        %1218 = vst [vmem:[%s336 + $0xf8] sm:$0xff] %v1185
        %s1219 = sand.u32 %s166, 1
        %s1220 = scalar_lea.sflag [#allocation4], %s1219
        %s1221 = sand.u32 %s166, 1
        %s1222 = smul.addr %s1221, 256
        %s1223 = scalar_lea.vmem [#allocation10], %s1222
        // Predicated region
        $region57: #{tpu_custom_call.1} parent=39 // pred_check
          %p1224 = pneg %p176
        $region58: #{tpu_custom_call.1} parent=39 // pred_check_branch
          %1226 = sbr.rel (%p1224) target = $region60
        $region59: #{tpu_custom_call.1} parent=39 // pred_region
          %s1227 = smul.u32 16, %s29
          %s1228 = smul.u32 2, %s28
          %1230 = vsyncadd %s1220, 0
          %s1231 = smul.addr %s1227, 6
          %s1232 = sadd.s32 %s1228, %s1231
          %s1233 = smul.addr %s1232, 8
          %s1234 = scalar_lea.hbm %s5, %s1233
          %s1235 = sshll.u32 %s1223, 4
          %s1236 = int_to_ptr.vmem [resolvable:$true] %s1235
          %s1237 = sshll.u32 %s1234, 4
          %s1238 = int_to_ptr.hbm [resolvable:$true] %s1237
          %1243 = dma.vmem_to_hbm [thread:$0]  %s1236, 4096, %s1238, %s1220, 256, 768, 16
        $region60: #{tpu_custom_call.1} parent=39 // pred_fallthru
          _
      $region40: #{tpu_custom_call.1} parent=5 // pred_fallthru
        _
      %p1244 = scmp.le.s32.totalorder 2, %s19
      // Predicated region
      $region61: #{tpu_custom_call.1} parent=5 // pred_check
        %p1245 = pneg %p1244
      $region62: #{tpu_custom_call.1} parent=5 // pred_check_branch
        %1247 = sbr.rel (%p1245) target = $region64
      $region63: #{tpu_custom_call.1} parent=5 // pred_region
        %s1248 = ssub.s32 %s19, 2
        // Predicated region
        $region65: #{tpu_custom_call.1} parent=63 // pred_check
          %p1249 = pneg %p182
        $region66: #{tpu_custom_call.1} parent=63 // pred_check_branch
          %1251 = sbr.rel (%p1249) target = $region68
        $region67: #{tpu_custom_call.1} parent=63 // pred_region
          %s1252 = sand.u32 %s167, 1
          %s1253 = scalar_lea.sflag [#allocation4], %s1252
          %s1254 = sand.u32 %s167, 1
          %s1255 = smul.addr %s1254, 256
          %s1256 = scalar_lea.vmem [#allocation10], %s1255
          %1258 = dma.done %s1253, 4096
        $region68: #{tpu_custom_call.1} parent=63 // pred_fallthru
          _
      $region64: #{tpu_custom_call.1} parent=5 // pred_fallthru
        _
    $region6: #{tpu_custom_call.1} parent=1 // loop_footer
      %s23 = sadd.s32 1, %s19
    $region7: #{tpu_custom_call.1} parent=1 // loop_footer_branch
      %18 = sbr.rel target = $region3
    $region8: #{tpu_custom_call.1} parent=1 // loop_exit
      _
    %1259 = vsyncpa [#allocation3], 1
    %s1260 = scalar_lea.sflag [#allocation3], 1
    %1261 = vsyncpa %s1260, 1
    %1262 = vsyncpa [#allocation6], 1
    %s1263 = scalar_lea.sflag [#allocation6], 1
    %1264 = vsyncpa %s1263, 1
    %1265 = vsyncpa [#allocation9], 1
    %1266 = vsyncpa [#allocation4], 1
    %s1267 = scalar_lea.sflag [#allocation4], 1
    %1268 = vsyncpa %s1267, 1

</llo_original>
